<compile_context>
chip_gen: v5e
topology: v5e:2x2
jax: 0.10.0
libtpu: 0.0.40
codegen_flags: <defaults>
</compile_context>

<pallas_src>
import dataclasses
import functools
import math

import jax
import jax.numpy as jnp
from jax.experimental import pallas as pl
from jax.experimental.pallas import tpu as pltpu


def _round_up(a: int, m: int) -> int:
    return (a + m - 1) // m * m


def _cdiv(a: int, b: int) -> int:
    return (a + b - 1) // b


def _vmem_capacity_bytes() -> int:
    """Best-effort per-core VMEM capacity; conservative 64 MiB fallback."""
    try:
        info = pltpu.get_tpu_info()
        for attr in ("vmem_capacity_bytes", "vmem_bytes", "vmem_size_bytes"):
            v = getattr(info, attr, None)
            if isinstance(v, int) and v > 0:
                return v
    except Exception:
        pass
    try:
        kind = jax.devices()[0].device_kind.lower()
    except Exception:
        kind = ""
    if ("v4" in kind) or ("v5" in kind) or ("v6" in kind):
        return 128 * 1024 * 1024
    return 64 * 1024 * 1024  # v7x / unknown: conservative


def _even_split(total_units: int, target_units: int):
    """Split `total_units` into even-ish blocks of <= ~target_units.

    Returns (block_units, n_blocks) with block_units * n_blocks >= total_units
    and minimal overshoot, so the axis has no ragged partial block.
    """
    n_blocks = max(1, _cdiv(total_units, target_units))
    block_units = _cdiv(total_units, n_blocks)
    return block_units, n_blocks


@dataclasses.dataclass(frozen=True)
class _Plan:
    compute_dtype: object   # numpy dtype of the MXU operands
    m_align: int            # sublane-pack multiple for the compute dtype
    tm_target: int
    tn: int
    tk: int
    K: int                  # original feature dims
    N: int
    Kp: int                 # padded (even-block) dims
    Np: int
    n_blocks: int
    k_blocks: int
    vmem_limit: int


def _fc2_kernel(x_ref, w_ref, b_ref, o_ref, *acc, nk):
    # x_ref: (tm, tk) compute dtype, w_ref: (tk, tn) compute dtype,
    # b_ref: (1, tn) f32, o_ref: (tm, tn) out dtype,
    # acc: optional (tm, tn) f32 scratch (only when nk > 1).
    partial = jnp.dot(x_ref[...], w_ref[...], preferred_element_type=jnp.float32)

    if nk == 1:
        # Single K step: no accumulator round-trip at all.
        o_ref[...] = jnp.maximum(partial + b_ref[...], 0.0).astype(o_ref.dtype)
        return

    acc_ref = acc[0]
    k = pl.program_id(2)

    @pl.when(k == 0)
    def _init():
        acc_ref[...] = partial

    @pl.when(jnp.logical_and(k > 0, k < nk - 1))
    def _accumulate():
        acc_ref[...] += partial

    @pl.when(k == nk - 1)
    def _finalize():
        # Fused epilogue: skip the final acc write-back + reload.
        y = acc_ref[...] + partial + b_ref[...]
        o_ref[...] = jnp.maximum(y, 0.0).astype(o_ref.dtype)


def _fc2_forward(x, w_kn, b_1n, plan: _Plan):
    B, K = x.shape
    assert K == plan.K, "input feature dim mismatch with prepared weights"
    out_dtype = x.dtype

    if x.dtype != plan.compute_dtype:
        x = x.astype(plan.compute_dtype)

    # M tiling: align to the sublane-pack multiple, even-ish blocks <= tm_target.
    Bp = _round_up(B, plan.m_align)
    tm_u, _ = _even_split(Bp // plan.m_align, plan.tm_target // plan.m_align)
    tm = tm_u * plan.m_align
    grid_m = _cdiv(Bp, tm)

    tn, n_blocks = plan.tn, plan.n_blocks
    if grid_m == 1 and n_blocks == 1 and plan.Np >= 256:
        # Keep both v7x TensorCores busy: split the (only) parallel axis.
        tn = _round_up(plan.Np // 2, 128)
        n_blocks = _cdiv(plan.Np, tn)

    # Only K padding must be zero (it feeds the accumulation); the tiny M pad
    # keeps the bf16 (16, 128) block tiling exact.  N/K of the weight were
    # padded once at prepare time.
    if Bp != B or plan.Kp != K:
        x = jnp.pad(x, ((0, Bp - B), (0, plan.Kp - K)))

    nk = plan.k_blocks
    kernel = functools.partial(_fc2_kernel, nk=nk)
    scratch = [pltpu.VMEM((tm, tn), jnp.float32)] if nk > 1 else []

    x_item = jnp.dtype(plan.compute_dtype).itemsize
    cost = pl.CostEstimate(
        flops=2 * Bp * plan.Kp * plan.Np,
        transcendentals=0,
        bytes_accessed=(
            n_blocks * Bp * plan.Kp * x_item          # x streamed once per N block
            + grid_m * plan.Kp * plan.Np * x_item     # w streamed once per M block
            + grid_m * plan.Np * 4                    # bias
            + Bp * plan.Np * jnp.dtype(out_dtype).itemsize  # y written once
        ),
    )

    y = pl.pallas_call(
        kernel,
        out_shape=jax.ShapeDtypeStruct((Bp, plan.Np), out_dtype),
        grid_spec=pltpu.PrefetchScalarGridSpec(
            num_scalar_prefetch=0,
            grid=(grid_m, n_blocks, nk),
            in_specs=[
                pl.BlockSpec((tm, plan.tk), lambda i, j, k: (i, k)),   # x tile
                pl.BlockSpec((plan.tk, tn), lambda i, j, k: (k, j)),   # w tile (K,N)
                pl.BlockSpec((1, tn), lambda i, j, k: (0, j)),         # bias tile
            ],
            out_specs=pl.BlockSpec((tm, tn), lambda i, j, k: (i, j)),
            scratch_shapes=scratch,
        ),
        compiler_params=pltpu.CompilerParams(
            dimension_semantics=("parallel", "parallel", "arbitrary"),
            vmem_limit_bytes=plan.vmem_limit,
        ),
        cost_estimate=cost,
    )(x, w_kn, b_1n)

    return y[:B, :plan.N]


def fc2_prepare(w, b, *, compute_dtype=jnp.bfloat16, jit=True):
    """One-time packing of an nn.Linear weight for the Pallas FC2 kernel.

    w: (out, in) in PyTorch nn.Linear layout, b: (out,).
    Returns a callable `layer(x) -> relu(x @ w.T + b)`; all weight layout work
    (transpose, cast, pad) happens here, not per forward call.
    """
    w = jnp.asarray(w)
    b = jnp.asarray(b)
    N, K = w.shape
    assert b.shape == (N,)

    itemsize = jnp.dtype(compute_dtype).itemsize
    m_align = {4: 8, 2: 16, 1: 32}[itemsize]

    vmem = _vmem_capacity_bytes()
    big = vmem >= 100 * 1024 * 1024           # v4 / v5e / v6e class (128 MiB)
    tm_target = 512
    tn_target = 512                           # multiple of 256 for v6e/v7x MXU
    if itemsize >= 4:
        tk_target = 1024 if big else 512
    else:
        tk_target = 2048 if big else 1024
    vmem_limit = (96 if big else 48) * 1024 * 1024

    tk_u, k_blocks = _even_split(_cdiv(K, 128), tk_target // 128)
    tn_u, n_blocks = _even_split(_cdiv(N, 128), tn_target // 128)
    tk, tn = tk_u * 128, tn_u * 128
    Kp, Np = tk * k_blocks, tn * n_blocks

    plan = _Plan(
        compute_dtype=jnp.dtype(compute_dtype), m_align=m_align,
        tm_target=tm_target, tn=tn, tk=tk,
        K=K, N=N, Kp=Kp, Np=Np,
        n_blocks=n_blocks, k_blocks=k_blocks,
        vmem_limit=vmem_limit,
    )

    # One-time layout plumbing: (K, N) weight, MXU operand dtype, zero-padded
    # along K (mathematically inert for the accumulation) and N (lane-dense).
    w_kn = jnp.pad(w.T.astype(compute_dtype), ((0, Kp - K), (0, Np - N)))
    b_1n = jnp.pad(b.astype(jnp.float32), (0, Np - N)).reshape(1, Np)

    def apply(x):
        return _fc2_forward(x, w_kn, b_1n, plan)

    return jax.jit(apply) if jit else apply


if __name__ == "__main__":
    def ref_fc2(x, w, b):
        y = jnp.matmul(x, w.T, precision=jax.lax.Precision.HIGHEST) + b
        return jnp.maximum(y, 0.0)

    # --- Test 1: small, module-consistent shapes (batch=8, input_dim=32, out=16)
    B, input_dim, out_dim = 8, 32, 16
    kx, kw, kb = jax.random.split(jax.random.PRNGKey(0), 3)
    bound = 1.0 / math.sqrt(input_dim)
    w = jax.random.uniform(kw, (out_dim, input_dim), jnp.float32, -bound, bound)
    b = jax.random.uniform(kb, (out_dim,), jnp.float32, -bound, bound)
    x = jax.random.normal(kx, (B, input_dim), jnp.float32)

    layer_bf16 = fc2_prepare(w, b)                              # default bf16 operands
    y = layer_bf16(x)
    jax.block_until_ready(y)
    assert y.shape == (B, out_dim) and y.dtype == x.dtype
    assert jnp.allclose(y, ref_fc2(x, w, b), atol=2e-2, rtol=2e-2)

    layer_f32 = fc2_prepare(w, b, compute_dtype=jnp.float32)    # tight-tolerance path
    y32 = layer_f32(x)
    jax.block_until_ready(y32)
    assert jnp.allclose(y32, ref_fc2(x, w, b), atol=1e-4, rtol=1e-4)

    # --- Test 2: awkward shapes exercising K accumulation, K/N padding and
    #             the masked M boundary (B=72, K=2176, N=200).
    B2, K2, N2 = 72, 2176, 200
    kx2, kw2, kb2 = jax.random.split(jax.random.PRNGKey(1), 3)
    bound2 = 1.0 / math.sqrt(K2)
    w2 = jax.random.uniform(kw2, (N2, K2), jnp.float32, -bound2, bound2)
    b2 = jax.random.uniform(kb2, (N2,), jnp.float32, -bound2, bound2)
    x2 = jax.random.normal(kx2, (B2, K2), jnp.float32)
    y_ref2 = ref_fc2(x2, w2, b2)

    y2_f32 = fc2_prepare(w2, b2, compute_dtype=jnp.float32)(x2)
    jax.block_until_ready(y2_f32)
    assert y2_f32.shape == (B2, N2)
    assert jnp.allclose(y2_f32, y_ref2, atol=5e-4, rtol=5e-4)

    y2_bf16 = fc2_prepare(w2, b2)(x2)
    jax.block_until_ready(y2_bf16)
    assert y2_bf16.shape == (B2, N2)
    assert jnp.allclose(y2_bf16, y_ref2, atol=5e-2, rtol=5e-2)

    print("KERNEL_OK")
</pallas_src>

<mosaic_0001>
module attributes {stable_mosaic.version = 11 : i64} {
  func.func @_fc2_kernel(%arg0: i32, %arg1: i32, %arg2: i32, %arg3: memref<16x128xbf16, #tpu.memory_space<vmem>>, %arg4: memref<128x128xbf16, #tpu.memory_space<vmem>>, %arg5: memref<1x128xf32, #tpu.memory_space<vmem>>, %arg6: memref<16x128xf32, #tpu.memory_space<vmem>>) attributes {dimension_semantics = [#tpu.dimension_semantics<parallel>, #tpu.dimension_semantics<parallel>, #tpu.dimension_semantics<arbitrary>], iteration_bounds = array<i64: 1, 1, 1>, scalar_prefetch = 0 : i64, scratch_operands = 0 : i64, tpu.core_type = #tpu.core_type<tc>, window_params = [{transform_indices = @transform_0, window_bounds = array<i64: 16, 128>}, {transform_indices = @transform_1, window_bounds = array<i64: 128, 128>}, {transform_indices = @transform_2, window_bounds = array<i64: 1, 128>}, {transform_indices = @transform_3, window_bounds = array<i64: 16, 128>}]} {
    %c0 = arith.constant 0 : index
    %c0_0 = arith.constant 0 : index
    %0 = vector.load %arg3[%c0, %c0_0] : memref<16x128xbf16, #tpu.memory_space<vmem>>, vector<16x128xbf16>
    %c0_1 = arith.constant 0 : index
    %c0_2 = arith.constant 0 : index
    %1 = vector.load %arg4[%c0_1, %c0_2] : memref<128x128xbf16, #tpu.memory_space<vmem>>, vector<128x128xbf16>
    %cst = arith.constant dense<0.000000e+00> : vector<16x128xf32>
    %2 = tpu.matmul %0, %1, %cst {dimension_numbers = #tpu.dot_dimension_numbers<[1], [0], [0], [1], [0, 0, 1, 1], [], []>} : vector<16x128xbf16>, vector<128x128xbf16>, vector<16x128xf32> -> vector<16x128xf32>
    %c0_3 = arith.constant 0 : index
    %c0_4 = arith.constant 0 : index
    %3 = vector.load %arg5[%c0_3, %c0_4] : memref<1x128xf32, #tpu.memory_space<vmem>>, vector<1x128xf32>
    %4 = vector.broadcast %3 : vector<1x128xf32> to vector<16x128xf32>
    %5 = arith.addf %2, %4 : vector<16x128xf32>
    %cst_5 = arith.constant 0.000000e+00 : f32
    %6 = vector.broadcast %cst_5 : f32 to vector<16x128xf32>
    %7 = arith.maximumf %5, %6 : vector<16x128xf32>
    %c0_6 = arith.constant 0 : index
    %c0_7 = arith.constant 0 : index
    %8 = vector.load %arg6[%c0_6, %c0_7] : memref<16x128xf32, #tpu.memory_space<vmem>>, vector<16x128xf32>
    tpu.vector_store %arg6[%c0_6, %c0_7], %7 {strides = array<i32>} : memref<16x128xf32, #tpu.memory_space<vmem>>, vector<16x128xf32>,
    return
  }
  func.func @transform_0(%arg0: i32, %arg1: i32, %arg2: i32) -> (i32, i32) {
    %c0_i32 = arith.constant 0 : i32
    return %arg0, %arg2 : i32, i32
  }
  func.func @transform_1(%arg0: i32, %arg1: i32, %arg2: i32) -> (i32, i32) {
    %c0_i32 = arith.constant 0 : i32
    return %arg2, %arg1 : i32, i32
  }
  func.func @transform_2(%arg0: i32, %arg1: i32, %arg2: i32) -> (i32, i32) {
    %c0_i32 = arith.constant 0 : i32
    %c0_i32_0 = arith.constant 0 : i32
    return %c0_i32, %arg1 : i32, i32
  }
  func.func @transform_3(%arg0: i32, %arg1: i32, %arg2: i32) -> (i32, i32) {
    %c0_i32 = arith.constant 0 : i32
    return %arg0, %arg1 : i32, i32
  }
}

</mosaic_0001>

<llo_original>
// kernel: apply.1
$region0: #{apply.1}
  #allocation0 [shape = 'u32[]', space=smem, size = 0x4, offset = 0x4, fixed_abs, tag = 'smem constant byte address 0x4 - core index']
  #allocation1 [shape = 'u32[72,128]{1,0:T(1,128)}', space=vmem, size = 0x9000, scoped, tag = 'internal scratch']
  %s0 = inlined_call_operand.vmem [shape: bf16[16,128], index: 0, kind: input, shape index: {}]
  %s1 = inlined_call_operand.hbm [shape: bf16[128,128], index: 1, kind: input, shape index: {}]
  %s2 = inlined_call_operand.vmem [shape: f32[1,128], index: 2, kind: input, shape index: {}]
  %s3 = inlined_call_operand.vmem [shape: f32[16,128], index: 3, kind: output, shape index: {}]
  %s4 = sld [smem:[#allocation0]]
  $region26: #{apply.1} parent=0
    _
  %s6 = ssub.s32 1, %s4
  %s7 = scalar_select 0, %s6, %s4
  $region1: #{apply.1} parent=0
    #allocation2 [shape = 'u8[32768]{0}', space=vmem, size = 0x8000, scoped, tag = 'input window, operand 1, single buffered']
    #allocation3 [shape = 's32[1]{0}', space=sflag, size = 0x4, scoped, tag = 'scoped memory for apply.1']
    %8 = vsyncpa [#allocation3], 0
    // Predicated region
    $region2: #{apply.1} parent=1 // pred_check
      _
    $region3: #{apply.1} parent=1 // pred_check_branch
      %10 = sbr.rel (0) target = $region5
    $region4: #{apply.1} parent=1 // pred_region
      _
    $region5: #{apply.1} parent=1 // pred_fallthru
      _
    // Predicated region
    $region6: #{apply.1} parent=1 // pred_check
      _
    $region7: #{apply.1} parent=1 // pred_check_branch
      %12 = sbr.rel (0) target = $region9
    $region8: #{apply.1} parent=1 // pred_region
      %14 = vsyncadd [#allocation3], 0
      %s15 = sshll.u32 %s1, 4
      %s16 = int_to_ptr.hbm [resolvable:$true] %s15
      %s17 = sshll.u32 [#allocation2], 4
      %s18 = int_to_ptr.vmem [resolvable:$true] %s17
      %23 = dma.hbm_to_vmem [thread:$0]  %s16, 1024, %s18, [#allocation3], 64, 64, 4
    $region9: #{apply.1} parent=1 // pred_fallthru
      _
    // Predicated region
    $region10: #{apply.1} parent=1 // pred_check
      _
    $region11: #{apply.1} parent=1 // pred_check_branch
      %25 = sbr.rel (0) target = $region13
    $region12: #{apply.1} parent=1 // pred_region
      _
    $region13: #{apply.1} parent=1 // pred_fallthru
      _
    // Predicated region
    $region14: #{apply.1} parent=1 // pred_check
      _
    $region15: #{apply.1} parent=1 // pred_check_branch
      %27 = sbr.rel (0) target = $region17
    $region16: #{apply.1} parent=1 // pred_region
      %29 = dma.done [#allocation3], 1024
    $region17: #{apply.1} parent=1 // pred_fallthru
      _
    %v30 = vld [vmem:[%s0] sm:$0xf]
    %v31 = vld [vmem:[%s0 + $0x4] sm:$0xf]
    %v32 = vld [vmem:[#allocation2] sm:$0xf]
    %v33 = vld [vmem:[#allocation2 + $0x4] sm:$0xf]
    %v34 = vld [vmem:[#allocation2 + $0x8] sm:$0xf]
    %v35 = vld [vmem:[#allocation2 + $0xc] sm:$0xf]
    %v36 = vld [vmem:[#allocation2 + $0x10] sm:$0xf]
    %v37 = vld [vmem:[#allocation2 + $0x14] sm:$0xf]
    %v38 = vld [vmem:[#allocation2 + $0x18] sm:$0xf]
    %v39 = vld [vmem:[#allocation2 + $0x1c] sm:$0xf]
    %v40 = vld [vmem:[#allocation2 + $0x20] sm:$0xf]
    %v41 = vld [vmem:[#allocation2 + $0x24] sm:$0xf]
    %v42 = vld [vmem:[#allocation2 + $0x28] sm:$0xf]
    %v43 = vld [vmem:[#allocation2 + $0x2c] sm:$0xf]
    %v44 = vld [vmem:[#allocation2 + $0x30] sm:$0xf]
    %v45 = vld [vmem:[#allocation2 + $0x34] sm:$0xf]
    %v46 = vld [vmem:[#allocation2 + $0x38] sm:$0xf]
    %v47 = vld [vmem:[#allocation2 + $0x3c] sm:$0xf]
    %v48 = vld [vmem:[%s2] sm:$0x1]
    %v50 = vperm.slane %v48, 0
    %v54 = vunpack.c.l.b16 %v30
    %v55 = vunpack.c.l.b16 %v31
    %v56 = vpack.c.b16 %v55, %v54
    %v74 = vunpack.c.l.b16 %v32
    %v75 = vunpack.c.l.b16 %v33
    %v76 = vunpack.c.l.b16 %v34
    %v77 = vunpack.c.l.b16 %v35
    %v78 = vunpack.c.l.b16 %v36
    %v79 = vunpack.c.l.b16 %v37
    %v80 = vunpack.c.l.b16 %v38
    %v81 = vunpack.c.l.b16 %v39
    %v82 = vunpack.c.l.b16 %v40
    %v83 = vunpack.c.l.b16 %v41
    %v84 = vunpack.c.l.b16 %v42
    %v85 = vunpack.c.l.b16 %v43
    %v86 = vunpack.c.l.b16 %v44
    %v87 = vunpack.c.l.b16 %v45
    %v88 = vunpack.c.l.b16 %v46
    %v89 = vunpack.c.l.b16 %v47
    %v90 = vpack.c.b16 %v75, %v74
    %v91 = vpack.c.b16 %v77, %v76
    %v92 = vpack.c.b16 %v79, %v78
    %v93 = vpack.c.b16 %v81, %v80
    %v94 = vpack.c.b16 %v83, %v82
    %v95 = vpack.c.b16 %v85, %v84
    %v96 = vpack.c.b16 %v87, %v86
    %v97 = vpack.c.b16 %v89, %v88
    %106 = vmatpush.bf16.msra.mxu0 %v97
    %107 = vmatpush.bf16.msra.mxu0 %v96
    %108 = vmatpush.bf16.msra.mxu0 %v95
    %109 = vmatpush.bf16.msra.mxu0 %v94
    %110 = vmatpush.bf16.msra.mxu0 %v93
    %111 = vmatpush.bf16.msra.mxu0 %v92
    %112 = vmatpush.bf16.msra.mxu0 %v91
    %113 = vmatpush.bf16.msra.mxu0 %v90
    %114 = vmatmul.bf16.gmra.mxu0 %v56
    %v115 = vpop.f32.mrf.mxu0
    %v116 = vadd.f32 %v50, %v115
    %v117 = vpop.f32.mrf.mxu0
    %v118 = vadd.f32 %v50, %v117
    %119 = vdwg.mxu0
    %v120 = vmax.f32 %v116, 0.0
    %v121 = vmax.f32 %v118, 0.0
    %122 = vst [vmem:[%s3] sm:$0xff] %v120
    %123 = vst [vmem:[%s3 + $0x8] sm:$0xff] %v121
    // Predicated region
    $region18: #{apply.1} parent=1 // pred_check
      _
    $region19: #{apply.1} parent=1 // pred_check_branch
      %125 = sbr.rel (0) target = $region21
    $region20: #{apply.1} parent=1 // pred_region
      _
    $region21: #{apply.1} parent=1 // pred_fallthru
      _
    // Predicated region
    $region22: #{apply.1} parent=1 // pred_check
      _
    $region23: #{apply.1} parent=1 // pred_check_branch
      %127 = sbr.rel (0) target = $region25
    $region24: #{apply.1} parent=1 // pred_region
      _
    $region25: #{apply.1} parent=1 // pred_fallthru
      _
    %128 = vsyncpa [#allocation3], 1

</llo_original>
